<compile_context>
chip_gen: v6e
topology: v6e:2x2x1
jax: 0.10.0
libtpu: 0.0.40
codegen_flags: <defaults>
</compile_context>

<pallas_src>
import functools
import math

import jax
import jax.numpy as jnp
from jax import lax
from jax.experimental import pallas as pl
from jax.experimental.pallas import tpu as pltpu


def _round_up(x, m):
    return (x + m - 1) // m * m


def _rnn_chunk_kernel(gates_ref, whh_ref, h_ref, *, seq_len, interleave,
                      unroll, mask_time):
    """One batch tile x one time chunk of the tanh-RNN recurrence.

    gates_ref : (Tc, bt, Hp)  precomputed x_t @ W_ih^T + (b_ih + b_hh), time-major
    whh_ref   : (Hp, Hp)      W_hh^T, zero padded (f32 or bf16)
    h_ref     : (bt, Hp)      hidden-state carry; resident across the time-chunk
                              grid axis (same block index for every chunk) and
                              holds h_T after the last chunk.
    """
    k = pl.program_id(1)
    t_chunk, bt, _ = gates_ref.shape

    @pl.when(k == 0)
    def _():
        h_ref[...] = jnp.zeros_like(h_ref)

    whh = whh_ref[...]                      # loop-invariant, resident in vregs
    t_base = k * t_chunk

    def chain_step(g, h):
        # dot -> add -> tanh; MXU operand dtype follows whh (f32 or bf16),
        # accumulation and activation stay f32.
        pre = g.astype(jnp.float32) + jnp.dot(
            h.astype(whh.dtype), whh, preferred_element_type=jnp.float32)
        return jnp.tanh(pre)

    def maybe_mask(h_new, h_old, t):
        if not mask_time:
            return h_new
        # Padded timesteps become identity steps (scalar 0/1 blend; the scalar
        # splats to a vreg, cheap VPU work, no data-dependent control flow).
        m = ((t_base + t) < seq_len).astype(jnp.float32)
        return m * h_new + (1.0 - m) * h_old

    if interleave:
        # Two independent batch sub-chains: A's MXU push hides under B's tanh.
        half = bt // 2

        def step(t, carry):
            ha, hb = carry
            g_t = gates_ref[t]                           # (bt, Hp)
            na = maybe_mask(chain_step(g_t[:half], ha), ha, t)
            nb = maybe_mask(chain_step(g_t[half:], hb), hb, t)
            return (na, nb)

        h0 = h_ref[...]
        ha, hb = lax.fori_loop(0, t_chunk, step, (h0[:half], h0[half:]),
                               unroll=unroll)
        h_ref[...] = jnp.concatenate([ha, hb], axis=0)
    else:
        def step(t, h):
            g_t = gates_ref[t]
            return maybe_mask(chain_step(g_t, h), h, t)

        h_ref[...] = lax.fori_loop(0, t_chunk, step, h_ref[...], unroll=unroll)


def rnn_baseline_forward(x_btd, params, *, batch_tile=None, t_chunk=None,
                         mxu_bf16=False, gates_bf16=False):
    """Forward of RNNBaselineModel.  x_btd: (B, T, D) batch-first f32.
    Returns (B,) predicted RUL."""
    x_btd = x_btd.astype(jnp.float32)
    B, T, D = x_btd.shape
    H = params["w_hh"].shape[0]

    f32 = jnp.float32
    op_dtype = jnp.bfloat16 if mxu_bf16 else f32
    gate_dtype = jnp.bfloat16 if gates_bf16 else f32

    H_pad = _round_up(H, 128)                     # lane-dense hidden dim
    if batch_tile is None:
        # Feed the MXU with as many rows as the batch allows; never blow a
        # tiny batch up to 128 rows of wasted MXU/EUP work.
        batch_tile = min(128, _round_up(B, 8))
    batch_tile = max(8, _round_up(int(batch_tile), 8))
    if gates_bf16:
        batch_tile = _round_up(batch_tile, 16)    # bf16 sublane packing
    B_pad = _round_up(B, batch_tile)
    n_btiles = B_pad // batch_tile

    if t_chunk is None:
        t_chunk = min(T, 32)                      # bounds VMEM, streams gates
    t_chunk = max(1, min(int(t_chunk), T))
    T_pad = _round_up(T, t_chunk)
    n_tchunks = T_pad // t_chunk

    wih_t = jnp.transpose(params["w_ih"]).astype(f32)        # (D, H)
    whh_t = jnp.transpose(params["w_hh"]).astype(f32)        # (H, H)
    bias = (params["b_ih"] + params["b_hh"]).astype(f32)     # (H,)

    wih_tp = jnp.pad(wih_t, ((0, 0), (0, H_pad - H)))
    whh_tp = jnp.pad(whh_t, ((0, H_pad - H), (0, H_pad - H))).astype(op_dtype)
    bias_p = jnp.pad(bias, (0, H_pad - H))
    x_p = jnp.pad(x_btd, ((0, B_pad - B), (0, 0), (0, 0)))

    # Hoisted input projection: one big matmul over all timesteps, time-major.
    # (Padded batch rows pick up the bias and compute throwaway h — at most
    #  batch_tile-1 < 16 rows with the adaptive tile, sliced off below.)
    gates = jnp.einsum("btd,dh->tbh", x_p, wih_tp) + bias_p[None, None, :]
    gates = jnp.pad(gates, ((0, T_pad - T), (0, 0), (0, 0))).astype(gate_dtype)
    # gates: (T_pad, B_pad, H_pad)

    # Keep vreg pressure in check at wide batch tiles (g_t alone is 16 vregs
    # at bt=128); the serial carry means unroll only saves loop overhead.
    if batch_tile >= 64:
        unroll = min(t_chunk, 2)
    elif batch_tile >= 32:
        unroll = min(t_chunk, 4)
    else:
        unroll = min(t_chunk, 8)

    interleave = (batch_tile % 16 == 0)

    kernel = functools.partial(
        _rnn_chunk_kernel,
        seq_len=T,
        interleave=interleave,
        unroll=unroll,
        mask_time=(T_pad != T),
    )

    # VMEM budget: double-buffered gate chunks + W_hh + resident h carry.
    gates_blk = t_chunk * batch_tile * H_pad * jnp.dtype(gate_dtype).itemsize
    whh_blk = H_pad * H_pad * jnp.dtype(op_dtype).itemsize
    out_blk = batch_tile * H_pad * 4
    needed = 2 * (gates_blk + whh_blk + out_blk)
    vmem_limit = int(min(64 * 1024 * 1024, max(32 * 1024 * 1024, 2 * needed)))

    h_last = pl.pallas_call(
        kernel,
        out_shape=jax.ShapeDtypeStruct((B_pad, H_pad), jnp.float32),
        grid_spec=pltpu.PrefetchScalarGridSpec(
            num_scalar_prefetch=0,
            grid=(n_btiles, n_tchunks),           # time chunks last, "arbitrary"
            in_specs=[
                pl.BlockSpec((t_chunk, batch_tile, H_pad),
                             lambda i, k: (k, i, 0)),          # streamed gates
                pl.BlockSpec((H_pad, H_pad), lambda i, k: (0, 0)),  # W_hh^T
            ],
            out_specs=pl.BlockSpec((batch_tile, H_pad),
                                   lambda i, k: (i, 0)),       # h carry / h_T
        ),
        compiler_params=pltpu.CompilerParams(
            dimension_semantics=("parallel", "arbitrary"),
            vmem_limit_bytes=vmem_limit),
    )(gates, whh_tp)

    h_last = h_last[:B, :H]                        # drop batch / lane padding
    # Final Linear(hidden, 1) in the wrapper (1-lane store is a poor kernel fit).
    out = h_last @ jnp.transpose(params["w_fc"]).astype(f32) + params["b_fc"].astype(f32)
    return out[:, 0]


def init_params(key, input_dim, hidden_dim):
    # deterministic init mirroring PyTorch's U(-1/sqrt(H), 1/sqrt(H))
    ks = jax.random.split(key, 6)
    bound = 1.0 / math.sqrt(hidden_dim)
    u = lambda k, shape: jax.random.uniform(k, shape, jnp.float32, -bound, bound)
    return {
        "w_ih": u(ks[0], (hidden_dim, input_dim)),
        "w_hh": u(ks[1], (hidden_dim, hidden_dim)),
        "b_ih": u(ks[2], (hidden_dim,)),
        "b_hh": u(ks[3], (hidden_dim,)),
        "w_fc": u(ks[4], (1, hidden_dim)),
        "b_fc": u(ks[5], (1,)),
    }


def reference_forward(x, p):
    B, T, D = x.shape
    H = p["w_hh"].shape[0]
    h = jnp.zeros((B, H), jnp.float32)
    for t in range(T):
        h = jnp.tanh(x[:, t, :] @ p["w_ih"].T + p["b_ih"]
                     + h @ p["w_hh"].T + p["b_hh"])
    return (h @ p["w_fc"].T + p["b_fc"])[:, 0]


if __name__ == "__main__":
    key = jax.random.PRNGKey(0)
    D, H = 16, 64

    # Config 1: default path (single time chunk, single chain, f32).
    B, T = 8, 8
    kx, kp, key = jax.random.split(key, 3)
    x = jax.random.normal(kx, (B, T, D), jnp.float32)
    params = init_params(kp, D, H)
    fwd = jax.jit(rnn_baseline_forward)
    out = jax.block_until_ready(fwd(x, params))
    ref = reference_forward(x, params)
    assert out.shape == (B,), out.shape
    assert jnp.allclose(out, ref, atol=1e-4, rtol=1e-4), (out, ref)

    # Config 2: exercises time-chunk streaming, masked padded timesteps and
    # the two interleaved batch sub-chains (still f32, tight tolerance).
    B2, T2 = 32, 20
    kx2, key = jax.random.split(key)
    x2 = jax.random.normal(kx2, (B2, T2, D), jnp.float32)
    fwd2 = jax.jit(functools.partial(rnn_baseline_forward, t_chunk=8))
    out2 = jax.block_until_ready(fwd2(x2, params))
    ref2 = reference_forward(x2, params)
    assert out2.shape == (B2,), out2.shape
    assert jnp.allclose(out2, ref2, atol=1e-4, rtol=1e-4), (out2, ref2)

    # Config 3: perf mode — bf16 MXU operands + bf16 gate streaming
    # (looser tolerance, the MXU runs native bf16 with f32 accumulation).
    fwd3 = jax.jit(functools.partial(rnn_baseline_forward, t_chunk=8,
                                     mxu_bf16=True, gates_bf16=True))
    out3 = jax.block_until_ready(fwd3(x2, params))
    assert jnp.allclose(out3, ref2, atol=5e-2, rtol=5e-2), (out3, ref2)

    print("KERNEL_OK")
</pallas_src>

<mosaic_0001>
module attributes {stable_mosaic.version = 11 : i64} {
  func.func @_rnn_chunk_kernel(%arg0: i32, %arg1: i32, %arg2: memref<8x8x128xf32, #tpu.memory_space<vmem>>, %arg3: memref<128x128xf32, #tpu.memory_space<vmem>>, %arg4: memref<8x128xf32, #tpu.memory_space<vmem>>) attributes {dimension_semantics = [#tpu.dimension_semantics<parallel>, #tpu.dimension_semantics<arbitrary>], iteration_bounds = array<i64: 1, 1>, scalar_prefetch = 0 : i64, scratch_operands = 0 : i64, tpu.core_type = #tpu.core_type<tc>, window_params = [{transform_indices = @transform_0, window_bounds = array<i64: 8, 8, 128>}, {pipeline_mode = #tpu.pipeline_mode<synchronous>, transform_indices = @transform_1, window_bounds = array<i64: 128, 128>}, {transform_indices = @transform_2, window_bounds = array<i64: 8, 128>}]} {
    %c0_i32 = arith.constant 0 : i32
    %0 = arith.cmpi eq, %arg1, %c0_i32 : i32
    %1 = arith.extui %0 : i1 to i32
    %c0_i32_0 = arith.constant 0 : i32
    %2 = arith.cmpi ne, %1, %c0_i32_0 : i32
    scf.if %2 {
      %cst_30 = arith.constant 0.000000e+00 : f32
      %54 = vector.broadcast %cst_30 : f32 to vector<8x128xf32>
      %c0_31 = arith.constant 0 : index
      %c0_32 = arith.constant 0 : index
      %55 = vector.load %arg4[%c0_31, %c0_32] : memref<8x128xf32, #tpu.memory_space<vmem>>, vector<8x128xf32>
      tpu.vector_store %arg4[%c0_31, %c0_32], %54 {strides = array<i32>} : memref<8x128xf32, #tpu.memory_space<vmem>>, vector<8x128xf32>,
    } else {
    }
    %c0 = arith.constant 0 : index
    %c0_1 = arith.constant 0 : index
    %3 = vector.load %arg3[%c0, %c0_1] : memref<128x128xf32, #tpu.memory_space<vmem>>, vector<128x128xf32>
    %c0_2 = arith.constant 0 : index
    %c0_3 = arith.constant 0 : index
    %4 = vector.load %arg4[%c0_2, %c0_3] : memref<8x128xf32, #tpu.memory_space<vmem>>, vector<8x128xf32>
    %c0_i32_4 = arith.constant 0 : i32
    %5 = arith.index_cast %c0_i32_4 : i32 to index
    %c0_5 = arith.constant 0 : index
    %c0_6 = arith.constant 0 : index
    %6 = vector.load %arg2[%5, %c0_5, %c0_6] : memref<8x8x128xf32, #tpu.memory_space<vmem>>, vector<1x8x128xf32>
    %7 = vector.shape_cast %6 : vector<1x8x128xf32> to vector<8x128xf32>
    %cst = arith.constant dense<0.000000e+00> : vector<8x128xf32>
    %8 = tpu.matmul %4, %3, %cst {dimension_numbers = #tpu.dot_dimension_numbers<[1], [0], [0], [1], [0, 0, 1, 1], [], []>} : vector<8x128xf32>, vector<128x128xf32>, vector<8x128xf32> -> vector<8x128xf32>
    %9 = arith.addf %7, %8 : vector<8x128xf32>
    %10 = math.tanh %9 : vector<8x128xf32>
    %c1_i32 = arith.constant 1 : i32
    %11 = arith.index_cast %c1_i32 : i32 to index
    %c0_7 = arith.constant 0 : index
    %c0_8 = arith.constant 0 : index
    %12 = vector.load %arg2[%11, %c0_7, %c0_8] : memref<8x8x128xf32, #tpu.memory_space<vmem>>, vector<1x8x128xf32>
    %13 = vector.shape_cast %12 : vector<1x8x128xf32> to vector<8x128xf32>
    %cst_9 = arith.constant dense<0.000000e+00> : vector<8x128xf32>
    %14 = tpu.matmul %10, %3, %cst_9 {dimension_numbers = #tpu.dot_dimension_numbers<[1], [0], [0], [1], [0, 0, 1, 1], [], []>} : vector<8x128xf32>, vector<128x128xf32>, vector<8x128xf32> -> vector<8x128xf32>
    %15 = arith.addf %13, %14 : vector<8x128xf32>
    %16 = math.tanh %15 : vector<8x128xf32>
    %c2_i32 = arith.constant 2 : i32
    %17 = arith.index_cast %c2_i32 : i32 to index
    %c0_10 = arith.constant 0 : index
    %c0_11 = arith.constant 0 : index
    %18 = vector.load %arg2[%17, %c0_10, %c0_11] : memref<8x8x128xf32, #tpu.memory_space<vmem>>, vector<1x8x128xf32>
    %19 = vector.shape_cast %18 : vector<1x8x128xf32> to vector<8x128xf32>
    %cst_12 = arith.constant dense<0.000000e+00> : vector<8x128xf32>
    %20 = tpu.matmul %16, %3, %cst_12 {dimension_numbers = #tpu.dot_dimension_numbers<[1], [0], [0], [1], [0, 0, 1, 1], [], []>} : vector<8x128xf32>, vector<128x128xf32>, vector<8x128xf32> -> vector<8x128xf32>
    %21 = arith.addf %19, %20 : vector<8x128xf32>
    %22 = math.tanh %21 : vector<8x128xf32>
    %c3_i32 = arith.constant 3 : i32
    %23 = arith.index_cast %c3_i32 : i32 to index
    %c0_13 = arith.constant 0 : index
    %c0_14 = arith.constant 0 : index
    %24 = vector.load %arg2[%23, %c0_13, %c0_14] : memref<8x8x128xf32, #tpu.memory_space<vmem>>, vector<1x8x128xf32>
    %25 = vector.shape_cast %24 : vector<1x8x128xf32> to vector<8x128xf32>
    %cst_15 = arith.constant dense<0.000000e+00> : vector<8x128xf32>
    %26 = tpu.matmul %22, %3, %cst_15 {dimension_numbers = #tpu.dot_dimension_numbers<[1], [0], [0], [1], [0, 0, 1, 1], [], []>} : vector<8x128xf32>, vector<128x128xf32>, vector<8x128xf32> -> vector<8x128xf32>
    %27 = arith.addf %25, %26 : vector<8x128xf32>
    %28 = math.tanh %27 : vector<8x128xf32>
    %c4_i32 = arith.constant 4 : i32
    %29 = arith.index_cast %c4_i32 : i32 to index
    %c0_16 = arith.constant 0 : index
    %c0_17 = arith.constant 0 : index
    %30 = vector.load %arg2[%29, %c0_16, %c0_17] : memref<8x8x128xf32, #tpu.memory_space<vmem>>, vector<1x8x128xf32>
    %31 = vector.shape_cast %30 : vector<1x8x128xf32> to vector<8x128xf32>
    %cst_18 = arith.constant dense<0.000000e+00> : vector<8x128xf32>
    %32 = tpu.matmul %28, %3, %cst_18 {dimension_numbers = #tpu.dot_dimension_numbers<[1], [0], [0], [1], [0, 0, 1, 1], [], []>} : vector<8x128xf32>, vector<128x128xf32>, vector<8x128xf32> -> vector<8x128xf32>
    %33 = arith.addf %31, %32 : vector<8x128xf32>
    %34 = math.tanh %33 : vector<8x128xf32>
    %c5_i32 = arith.constant 5 : i32
    %35 = arith.index_cast %c5_i32 : i32 to index
    %c0_19 = arith.constant 0 : index
    %c0_20 = arith.constant 0 : index
    %36 = vector.load %arg2[%35, %c0_19, %c0_20] : memref<8x8x128xf32, #tpu.memory_space<vmem>>, vector<1x8x128xf32>
    %37 = vector.shape_cast %36 : vector<1x8x128xf32> to vector<8x128xf32>
    %cst_21 = arith.constant dense<0.000000e+00> : vector<8x128xf32>
    %38 = tpu.matmul %34, %3, %cst_21 {dimension_numbers = #tpu.dot_dimension_numbers<[1], [0], [0], [1], [0, 0, 1, 1], [], []>} : vector<8x128xf32>, vector<128x128xf32>, vector<8x128xf32> -> vector<8x128xf32>
    %39 = arith.addf %37, %38 : vector<8x128xf32>
    %40 = math.tanh %39 : vector<8x128xf32>
    %c6_i32 = arith.constant 6 : i32
    %41 = arith.index_cast %c6_i32 : i32 to index
    %c0_22 = arith.constant 0 : index
    %c0_23 = arith.constant 0 : index
    %42 = vector.load %arg2[%41, %c0_22, %c0_23] : memref<8x8x128xf32, #tpu.memory_space<vmem>>, vector<1x8x128xf32>
    %43 = vector.shape_cast %42 : vector<1x8x128xf32> to vector<8x128xf32>
    %cst_24 = arith.constant dense<0.000000e+00> : vector<8x128xf32>
    %44 = tpu.matmul %40, %3, %cst_24 {dimension_numbers = #tpu.dot_dimension_numbers<[1], [0], [0], [1], [0, 0, 1, 1], [], []>} : vector<8x128xf32>, vector<128x128xf32>, vector<8x128xf32> -> vector<8x128xf32>
    %45 = arith.addf %43, %44 : vector<8x128xf32>
    %46 = math.tanh %45 : vector<8x128xf32>
    %c7_i32 = arith.constant 7 : i32
    %47 = arith.index_cast %c7_i32 : i32 to index
    %c0_25 = arith.constant 0 : index
    %c0_26 = arith.constant 0 : index
    %48 = vector.load %arg2[%47, %c0_25, %c0_26] : memref<8x8x128xf32, #tpu.memory_space<vmem>>, vector<1x8x128xf32>
    %49 = vector.shape_cast %48 : vector<1x8x128xf32> to vector<8x128xf32>
    %cst_27 = arith.constant dense<0.000000e+00> : vector<8x128xf32>
    %50 = tpu.matmul %46, %3, %cst_27 {dimension_numbers = #tpu.dot_dimension_numbers<[1], [0], [0], [1], [0, 0, 1, 1], [], []>} : vector<8x128xf32>, vector<128x128xf32>, vector<8x128xf32> -> vector<8x128xf32>
    %51 = arith.addf %49, %50 : vector<8x128xf32>
    %52 = math.tanh %51 : vector<8x128xf32>
    %c8_i32 = arith.constant 8 : i32
    %c0_28 = arith.constant 0 : index
    %c0_29 = arith.constant 0 : index
    %53 = vector.load %arg4[%c0_28, %c0_29] : memref<8x128xf32, #tpu.memory_space<vmem>>, vector<8x128xf32>
    tpu.vector_store %arg4[%c0_28, %c0_29], %52 {strides = array<i32>} : memref<8x128xf32, #tpu.memory_space<vmem>>, vector<8x128xf32>,
    return
  }
  func.func @transform_0(%arg0: i32, %arg1: i32) -> (i32, i32, i32) {
    %c0_i32 = arith.constant 0 : i32
    %c0_i32_0 = arith.constant 0 : i32
    return %arg1, %arg0, %c0_i32 : i32, i32, i32
  }
  func.func @transform_1(%arg0: i32, %arg1: i32) -> (i32, i32) {
    %c0_i32 = arith.constant 0 : i32
    %c0_i32_0 = arith.constant 0 : i32
    %c0_i32_1 = arith.constant 0 : i32
    return %c0_i32, %c0_i32_0 : i32, i32
  }
  func.func @transform_2(%arg0: i32, %arg1: i32) -> (i32, i32) {
    %c0_i32 = arith.constant 0 : i32
    %c0_i32_0 = arith.constant 0 : i32
    return %arg0, %c0_i32 : i32, i32
  }
}

</mosaic_0001>

<llo_original>
// kernel: rnn_baseline_forward.1
$region0: #{rnn_baseline_forward.1}
  #allocation0 [shape = 'u32[]', space=smem, size = 0x4, offset = 0x4, fixed_abs, tag = 'smem constant byte address 0x4 - core index']
  #allocation1 [shape = 'u32[144,128]{1,0:T(1,128)}', space=vmem, size = 0x12000, scoped, tag = 'internal scratch']
  %s0 = inlined_call_operand.vmem [shape: f32[8,8,128], index: 0, kind: input, shape index: {}]
  %s1 = inlined_call_operand.vmem [shape: f32[128,128], index: 1, kind: input, shape index: {}]
  %s2 = inlined_call_operand.vmem [shape: f32[8,128], index: 2, kind: output, shape index: {}]
  %s3 = sld [smem:[#allocation0]]
  $region22: #{rnn_baseline_forward.1} parent=0
    _
  %s5 = ssub.s32 1, %s3
  %s6 = scalar_select 0, %s5, %s3
  // Predicated region
  $region2: #{rnn_baseline_forward.1} parent=0 // pred_check
    _
  $region3: #{rnn_baseline_forward.1} parent=0 // pred_check_branch
    %8 = sbr.rel (0) target = $region5
  $region4: #{rnn_baseline_forward.1} parent=0 // pred_region
    _
  $region5: #{rnn_baseline_forward.1} parent=0 // pred_fallthru
    _
  // Predicated region
  $region6: #{rnn_baseline_forward.1} parent=0 // pred_check
    _
  $region7: #{rnn_baseline_forward.1} parent=0 // pred_check_branch
    %10 = sbr.rel (0) target = $region9
  $region8: #{rnn_baseline_forward.1} parent=0 // pred_region
    _
  $region9: #{rnn_baseline_forward.1} parent=0 // pred_fallthru
    _
  %p11 = scmp.eq.s32.totalorder 0, 0
  // Predicated region
  $region10: #{rnn_baseline_forward.1} parent=0 // pred_check
    %p12 = pneg %p11
  $region11: #{rnn_baseline_forward.1} parent=0 // pred_check_branch
    %14 = sbr.rel (%p12) target = $region13
  $region12: #{rnn_baseline_forward.1} parent=0 // pred_region
    %15 = vst [vmem:[%s2] sm:$0xff] 0.0
  $region13: #{rnn_baseline_forward.1} parent=0 // pred_fallthru
    _
  %v16 = vld [vmem:[%s1] sm:$0xff]
  %v17 = vld [vmem:[%s1 + $0x8] sm:$0xff]
  %v18 = vld [vmem:[%s1 + $0x10] sm:$0xff]
  %v19 = vld [vmem:[%s1 + $0x18] sm:$0xff]
  %v20 = vld [vmem:[%s1 + $0x20] sm:$0xff]
  %v21 = vld [vmem:[%s1 + $0x28] sm:$0xff]
  %v22 = vld [vmem:[%s1 + $0x30] sm:$0xff]
  %v23 = vld [vmem:[%s1 + $0x38] sm:$0xff]
  %v24 = vld [vmem:[%s1 + $0x40] sm:$0xff]
  %v25 = vld [vmem:[%s1 + $0x48] sm:$0xff]
  %v26 = vld [vmem:[%s1 + $0x50] sm:$0xff]
  %v27 = vld [vmem:[%s1 + $0x58] sm:$0xff]
  %v28 = vld [vmem:[%s1 + $0x60] sm:$0xff]
  %v29 = vld [vmem:[%s1 + $0x68] sm:$0xff]
  %v30 = vld [vmem:[%s1 + $0x70] sm:$0xff]
  %v31 = vld [vmem:[%s1 + $0x78] sm:$0xff]
  %v32 = vld [vmem:[%s2] sm:$0xff]
  %v33 = vld [vmem:[%s0] sm:$0xff]
  %34 = vmatprep.subr.mxu0 0.0
  %35 = vmatpush1.msra.mxu0 %v31
  %36 = vmatprep.subr.mxu0 0.0
  %37 = vmatpush1.msra.mxu0 %v30
  %38 = vmatprep.subr.mxu0 0.0
  %39 = vmatpush1.msra.mxu0 %v29
  %40 = vmatprep.subr.mxu0 0.0
  %41 = vmatpush1.msra.mxu0 %v28
  %42 = vmatprep.subr.mxu0 0.0
  %43 = vmatpush1.msra.mxu0 %v27
  %44 = vmatprep.subr.mxu0 0.0
  %45 = vmatpush1.msra.mxu0 %v26
  %46 = vmatprep.subr.mxu0 0.0
  %47 = vmatpush1.msra.mxu0 %v25
  %48 = vmatprep.subr.mxu0 0.0
  %49 = vmatpush1.msra.mxu0 %v24
  %50 = vmatprep.subr.mxu0 0.0
  %51 = vmatpush1.msra.mxu0 %v23
  %52 = vmatprep.subr.mxu0 0.0
  %53 = vmatpush1.msra.mxu0 %v22
  %54 = vmatprep.subr.mxu0 0.0
  %55 = vmatpush1.msra.mxu0 %v21
  %56 = vmatprep.subr.mxu0 0.0
  %57 = vmatpush1.msra.mxu0 %v20
  %58 = vmatprep.subr.mxu0 0.0
  %59 = vmatpush1.msra.mxu0 %v19
  %60 = vmatprep.subr.mxu0 0.0
  %61 = vmatpush1.msra.mxu0 %v18
  %62 = vmatprep.subr.mxu0 0.0
  %63 = vmatpush1.msra.mxu0 %v17
  %64 = vmatprep.subr.mxu0 0.0
  %65 = vmatpush1.msra.mxu0 %v16
  %66 = vmatprep.subr.mxu0 0.0
  %67 = vmatpush2.msra.mxu0 0.0
  %68 = vmatprep.subr.mxu0 0.0
  %69 = vmatpush2.msra.mxu0 0.0
  %70 = vmatprep.subr.mxu0 0.0
  %71 = vmatpush2.msra.mxu0 0.0
  %72 = vmatprep.subr.mxu0 0.0
  %73 = vmatpush2.msra.mxu0 0.0
  %74 = vmatprep.subr.mxu0 0.0
  %75 = vmatpush2.msra.mxu0 0.0
  %76 = vmatprep.subr.mxu0 0.0
  %77 = vmatpush2.msra.mxu0 0.0
  %78 = vmatprep.subr.mxu0 0.0
  %79 = vmatpush2.msra.mxu0 0.0
  %80 = vmatprep.subr.mxu0 0.0
  %81 = vmatpush2.msra.mxu0 0.0
  %82 = vmatprep.subr.mxu0 0.0
  %83 = vmatpush2.msra.mxu0 0.0
  %84 = vmatprep.subr.mxu0 0.0
  %85 = vmatpush2.msra.mxu0 0.0
  %86 = vmatprep.subr.mxu0 0.0
  %87 = vmatpush2.msra.mxu0 0.0
  %88 = vmatprep.subr.mxu0 0.0
  %89 = vmatpush2.msra.mxu0 0.0
  %90 = vmatprep.subr.mxu0 0.0
  %91 = vmatpush2.msra.mxu0 0.0
  %92 = vmatprep.subr.mxu0 0.0
  %93 = vmatpush2.msra.mxu0 0.0
  %94 = vmatprep.subr.mxu0 0.0
  %95 = vmatpush2.msra.mxu0 0.0
  %96 = vmatprep.subr.mxu0 0.0
  %97 = vmatpush2.msra.mxu0 0.0
  %98 = vmatprep.mubr.f32.mxu0 0.0
  %99 = vmatmul.mubr.f32.gmra.mxu0 %v32
  %v100 = vpop.f32.mrf.mxu0
  %v101 = vadd.f32 0.0, %v100
  %v102 = vpop.f32.mrf.mxu0
  %103 = vdwg.mxu0
  %v104 = vadd.f32 %v33, %v101
  %v105 = vtanh.pop %v104
  %s106 = scalar_lea.vmem %s0, 8
  %v107 = vld [vmem:[%s106] sm:$0xff]
  %108 = vmatprep.subr.mxu0 0.0
  %109 = vmatpush1.msra.mxu0 %v31
  %110 = vmatprep.subr.mxu0 0.0
  %111 = vmatpush1.msra.mxu0 %v30
  %112 = vmatprep.subr.mxu0 0.0
  %113 = vmatpush1.msra.mxu0 %v29
  %114 = vmatprep.subr.mxu0 0.0
  %115 = vmatpush1.msra.mxu0 %v28
  %116 = vmatprep.subr.mxu0 0.0
  %117 = vmatpush1.msra.mxu0 %v27
  %118 = vmatprep.subr.mxu0 0.0
  %119 = vmatpush1.msra.mxu0 %v26
  %120 = vmatprep.subr.mxu0 0.0
  %121 = vmatpush1.msra.mxu0 %v25
  %122 = vmatprep.subr.mxu0 0.0
  %123 = vmatpush1.msra.mxu0 %v24
  %124 = vmatprep.subr.mxu0 0.0
  %125 = vmatpush1.msra.mxu0 %v23
  %126 = vmatprep.subr.mxu0 0.0
  %127 = vmatpush1.msra.mxu0 %v22
  %128 = vmatprep.subr.mxu0 0.0
  %129 = vmatpush1.msra.mxu0 %v21
  %130 = vmatprep.subr.mxu0 0.0
  %131 = vmatpush1.msra.mxu0 %v20
  %132 = vmatprep.subr.mxu0 0.0
  %133 = vmatpush1.msra.mxu0 %v19
  %134 = vmatprep.subr.mxu0 0.0
  %135 = vmatpush1.msra.mxu0 %v18
  %136 = vmatprep.subr.mxu0 0.0
  %137 = vmatpush1.msra.mxu0 %v17
  %138 = vmatprep.subr.mxu0 0.0
  %139 = vmatpush1.msra.mxu0 %v16
  %140 = vmatprep.subr.mxu0 0.0
  %141 = vmatpush2.msra.mxu0 0.0
  %142 = vmatprep.subr.mxu0 0.0
  %143 = vmatpush2.msra.mxu0 0.0
  %144 = vmatprep.subr.mxu0 0.0
  %145 = vmatpush2.msra.mxu0 0.0
  %146 = vmatprep.subr.mxu0 0.0
  %147 = vmatpush2.msra.mxu0 0.0
  %148 = vmatprep.subr.mxu0 0.0
  %149 = vmatpush2.msra.mxu0 0.0
  %150 = vmatprep.subr.mxu0 0.0
  %151 = vmatpush2.msra.mxu0 0.0
  %152 = vmatprep.subr.mxu0 0.0
  %153 = vmatpush2.msra.mxu0 0.0
  %154 = vmatprep.subr.mxu0 0.0
  %155 = vmatpush2.msra.mxu0 0.0
  %156 = vmatprep.subr.mxu0 0.0
  %157 = vmatpush2.msra.mxu0 0.0
  %158 = vmatprep.subr.mxu0 0.0
  %159 = vmatpush2.msra.mxu0 0.0
  %160 = vmatprep.subr.mxu0 0.0
  %161 = vmatpush2.msra.mxu0 0.0
  %162 = vmatprep.subr.mxu0 0.0
  %163 = vmatpush2.msra.mxu0 0.0
  %164 = vmatprep.subr.mxu0 0.0
  %165 = vmatpush2.msra.mxu0 0.0
  %166 = vmatprep.subr.mxu0 0.0
  %167 = vmatpush2.msra.mxu0 0.0
  %168 = vmatprep.subr.mxu0 0.0
  %169 = vmatpush2.msra.mxu0 0.0
  %170 = vmatprep.subr.mxu0 0.0
  %171 = vmatpush2.msra.mxu0 0.0
  %172 = vmatprep.mubr.f32.mxu0 0.0
  %173 = vmatmul.mubr.f32.gmra.mxu0 %v105
  %v174 = vpop.f32.mrf.mxu0
  %v175 = vadd.f32 0.0, %v174
  %v176 = vpop.f32.mrf.mxu0
  %177 = vdwg.mxu0
  %v178 = vadd.f32 %v107, %v175
  %v179 = vtanh.pop %v178
  %s180 = scalar_lea.vmem %s0, 16
  %v181 = vld [vmem:[%s180] sm:$0xff]
  %182 = vmatprep.subr.mxu0 0.0
  %183 = vmatpush1.msra.mxu0 %v31
  %184 = vmatprep.subr.mxu0 0.0
  %185 = vmatpush1.msra.mxu0 %v30
  %186 = vmatprep.subr.mxu0 0.0
  %187 = vmatpush1.msra.mxu0 %v29
  %188 = vmatprep.subr.mxu0 0.0
  %189 = vmatpush1.msra.mxu0 %v28
  %190 = vmatprep.subr.mxu0 0.0
  %191 = vmatpush1.msra.mxu0 %v27
  %192 = vmatprep.subr.mxu0 0.0
  %193 = vmatpush1.msra.mxu0 %v26
  %194 = vmatprep.subr.mxu0 0.0
  %195 = vmatpush1.msra.mxu0 %v25
  %196 = vmatprep.subr.mxu0 0.0
  %197 = vmatpush1.msra.mxu0 %v24
  %198 = vmatprep.subr.mxu0 0.0
  %199 = vmatpush1.msra.mxu0 %v23
  %200 = vmatprep.subr.mxu0 0.0
  %201 = vmatpush1.msra.mxu0 %v22
  %202 = vmatprep.subr.mxu0 0.0
  %203 = vmatpush1.msra.mxu0 %v21
  %204 = vmatprep.subr.mxu0 0.0
  %205 = vmatpush1.msra.mxu0 %v20
  %206 = vmatprep.subr.mxu0 0.0
  %207 = vmatpush1.msra.mxu0 %v19
  %208 = vmatprep.subr.mxu0 0.0
  %209 = vmatpush1.msra.mxu0 %v18
  %210 = vmatprep.subr.mxu0 0.0
  %211 = vmatpush1.msra.mxu0 %v17
  %212 = vmatprep.subr.mxu0 0.0
  %213 = vmatpush1.msra.mxu0 %v16
  %214 = vmatprep.subr.mxu0 0.0
  %215 = vmatpush2.msra.mxu0 0.0
  %216 = vmatprep.subr.mxu0 0.0
  %217 = vmatpush2.msra.mxu0 0.0
  %218 = vmatprep.subr.mxu0 0.0
  %219 = vmatpush2.msra.mxu0 0.0
  %220 = vmatprep.subr.mxu0 0.0
  %221 = vmatpush2.msra.mxu0 0.0
  %222 = vmatprep.subr.mxu0 0.0
  %223 = vmatpush2.msra.mxu0 0.0
  %224 = vmatprep.subr.mxu0 0.0
  %225 = vmatpush2.msra.mxu0 0.0
  %226 = vmatprep.subr.mxu0 0.0
  %227 = vmatpush2.msra.mxu0 0.0
  %228 = vmatprep.subr.mxu0 0.0
  %229 = vmatpush2.msra.mxu0 0.0
  %230 = vmatprep.subr.mxu0 0.0
  %231 = vmatpush2.msra.mxu0 0.0
  %232 = vmatprep.subr.mxu0 0.0
  %233 = vmatpush2.msra.mxu0 0.0
  %234 = vmatprep.subr.mxu0 0.0
  %235 = vmatpush2.msra.mxu0 0.0
  %236 = vmatprep.subr.mxu0 0.0
  %237 = vmatpush2.msra.mxu0 0.0
  %238 = vmatprep.subr.mxu0 0.0
  %239 = vmatpush2.msra.mxu0 0.0
  %240 = vmatprep.subr.mxu0 0.0
  %241 = vmatpush2.msra.mxu0 0.0
  %242 = vmatprep.subr.mxu0 0.0
  %243 = vmatpush2.msra.mxu0 0.0
  %244 = vmatprep.subr.mxu0 0.0
  %245 = vmatpush2.msra.mxu0 0.0
  %246 = vmatprep.mubr.f32.mxu0 0.0
  %247 = vmatmul.mubr.f32.gmra.mxu0 %v179
  %v248 = vpop.f32.mrf.mxu0
  %v249 = vadd.f32 0.0, %v248
  %v250 = vpop.f32.mrf.mxu0
  %251 = vdwg.mxu0
  %v252 = vadd.f32 %v181, %v249
  %v253 = vtanh.pop %v252
  %s254 = scalar_lea.vmem %s0, 24
  %v255 = vld [vmem:[%s254] sm:$0xff]
  %256 = vmatprep.subr.mxu0 0.0
  %257 = vmatpush1.msra.mxu0 %v31
  %258 = vmatprep.subr.mxu0 0.0
  %259 = vmatpush1.msra.mxu0 %v30
  %260 = vmatprep.subr.mxu0 0.0
  %261 = vmatpush1.msra.mxu0 %v29
  %262 = vmatprep.subr.mxu0 0.0
  %263 = vmatpush1.msra.mxu0 %v28
  %264 = vmatprep.subr.mxu0 0.0
  %265 = vmatpush1.msra.mxu0 %v27
  %266 = vmatprep.subr.mxu0 0.0
  %267 = vmatpush1.msra.mxu0 %v26
  %268 = vmatprep.subr.mxu0 0.0
  %269 = vmatpush1.msra.mxu0 %v25
  %270 = vmatprep.subr.mxu0 0.0
  %271 = vmatpush1.msra.mxu0 %v24
  %272 = vmatprep.subr.mxu0 0.0
  %273 = vmatpush1.msra.mxu0 %v23
  %274 = vmatprep.subr.mxu0 0.0
  %275 = vmatpush1.msra.mxu0 %v22
  %276 = vmatprep.subr.mxu0 0.0
  %277 = vmatpush1.msra.mxu0 %v21
  %278 = vmatprep.subr.mxu0 0.0
  %279 = vmatpush1.msra.mxu0 %v20
  %280 = vmatprep.subr.mxu0 0.0
  %281 = vmatpush1.msra.mxu0 %v19
  %282 = vmatprep.subr.mxu0 0.0
  %283 = vmatpush1.msra.mxu0 %v18
  %284 = vmatprep.subr.mxu0 0.0
  %285 = vmatpush1.msra.mxu0 %v17
  %286 = vmatprep.subr.mxu0 0.0
  %287 = vmatpush1.msra.mxu0 %v16
  %288 = vmatprep.subr.mxu0 0.0
  %289 = vmatpush2.msra.mxu0 0.0
  %290 = vmatprep.subr.mxu0 0.0
  %291 = vmatpush2.msra.mxu0 0.0
  %292 = vmatprep.subr.mxu0 0.0
  %293 = vmatpush2.msra.mxu0 0.0
  %294 = vmatprep.subr.mxu0 0.0
  %295 = vmatpush2.msra.mxu0 0.0
  %296 = vmatprep.subr.mxu0 0.0
  %297 = vmatpush2.msra.mxu0 0.0
  %298 = vmatprep.subr.mxu0 0.0
  %299 = vmatpush2.msra.mxu0 0.0
  %300 = vmatprep.subr.mxu0 0.0
  %301 = vmatpush2.msra.mxu0 0.0
  %302 = vmatprep.subr.mxu0 0.0
  %303 = vmatpush2.msra.mxu0 0.0
  %304 = vmatprep.subr.mxu0 0.0
  %305 = vmatpush2.msra.mxu0 0.0
  %306 = vmatprep.subr.mxu0 0.0
  %307 = vmatpush2.msra.mxu0 0.0
  %308 = vmatprep.subr.mxu0 0.0
  %309 = vmatpush2.msra.mxu0 0.0
  %310 = vmatprep.subr.mxu0 0.0
  %311 = vmatpush2.msra.mxu0 0.0
  %312 = vmatprep.subr.mxu0 0.0
  %313 = vmatpush2.msra.mxu0 0.0
  %314 = vmatprep.subr.mxu0 0.0
  %315 = vmatpush2.msra.mxu0 0.0
  %316 = vmatprep.subr.mxu0 0.0
  %317 = vmatpush2.msra.mxu0 0.0
  %318 = vmatprep.subr.mxu0 0.0
  %319 = vmatpush2.msra.mxu0 0.0
  %320 = vmatprep.mubr.f32.mxu0 0.0
  %321 = vmatmul.mubr.f32.gmra.mxu0 %v253
  %v322 = vpop.f32.mrf.mxu0
  %v323 = vadd.f32 0.0, %v322
  %v324 = vpop.f32.mrf.mxu0
  %325 = vdwg.mxu0
  %v326 = vadd.f32 %v255, %v323
  %v327 = vtanh.pop %v326
  %s328 = scalar_lea.vmem %s0, 32
  %v329 = vld [vmem:[%s328] sm:$0xff]
  %330 = vmatprep.subr.mxu0 0.0
  %331 = vmatpush1.msra.mxu0 %v31
  %332 = vmatprep.subr.mxu0 0.0
  %333 = vmatpush1.msra.mxu0 %v30
  %334 = vmatprep.subr.mxu0 0.0
  %335 = vmatpush1.msra.mxu0 %v29
  %336 = vmatprep.subr.mxu0 0.0
  %337 = vmatpush1.msra.mxu0 %v28
  %338 = vmatprep.subr.mxu0 0.0
  %339 = vmatpush1.msra.mxu0 %v27
  %340 = vmatprep.subr.mxu0 0.0
  %341 = vmatpush1.msra.mxu0 %v26
  %342 = vmatprep.subr.mxu0 0.0
  %343 = vmatpush1.msra.mxu0 %v25
  %344 = vmatprep.subr.mxu0 0.0
  %345 = vmatpush1.msra.mxu0 %v24
  %346 = vmatprep.subr.mxu0 0.0
  %347 = vmatpush1.msra.mxu0 %v23
  %348 = vmatprep.subr.mxu0 0.0
  %349 = vmatpush1.msra.mxu0 %v22
  %350 = vmatprep.subr.mxu0 0.0
  %351 = vmatpush1.msra.mxu0 %v21
  %352 = vmatprep.subr.mxu0 0.0
  %353 = vmatpush1.msra.mxu0 %v20
  %354 = vmatprep.subr.mxu0 0.0
  %355 = vmatpush1.msra.mxu0 %v19
  %356 = vmatprep.subr.mxu0 0.0
  %357 = vmatpush1.msra.mxu0 %v18
  %358 = vmatprep.subr.mxu0 0.0
  %359 = vmatpush1.msra.mxu0 %v17
  %360 = vmatprep.subr.mxu0 0.0
  %361 = vmatpush1.msra.mxu0 %v16
  %362 = vmatprep.subr.mxu0 0.0
  %363 = vmatpush2.msra.mxu0 0.0
  %364 = vmatprep.subr.mxu0 0.0
  %365 = vmatpush2.msra.mxu0 0.0
  %366 = vmatprep.subr.mxu0 0.0
  %367 = vmatpush2.msra.mxu0 0.0
  %368 = vmatprep.subr.mxu0 0.0
  %369 = vmatpush2.msra.mxu0 0.0
  %370 = vmatprep.subr.mxu0 0.0
  %371 = vmatpush2.msra.mxu0 0.0
  %372 = vmatprep.subr.mxu0 0.0
  %373 = vmatpush2.msra.mxu0 0.0
  %374 = vmatprep.subr.mxu0 0.0
  %375 = vmatpush2.msra.mxu0 0.0
  %376 = vmatprep.subr.mxu0 0.0
  %377 = vmatpush2.msra.mxu0 0.0
  %378 = vmatprep.subr.mxu0 0.0
  %379 = vmatpush2.msra.mxu0 0.0
  %380 = vmatprep.subr.mxu0 0.0
  %381 = vmatpush2.msra.mxu0 0.0
  %382 = vmatprep.subr.mxu0 0.0
  %383 = vmatpush2.msra.mxu0 0.0
  %384 = vmatprep.subr.mxu0 0.0
  %385 = vmatpush2.msra.mxu0 0.0
  %386 = vmatprep.subr.mxu0 0.0
  %387 = vmatpush2.msra.mxu0 0.0
  %388 = vmatprep.subr.mxu0 0.0
  %389 = vmatpush2.msra.mxu0 0.0
  %390 = vmatprep.subr.mxu0 0.0
  %391 = vmatpush2.msra.mxu0 0.0
  %392 = vmatprep.subr.mxu0 0.0
  %393 = vmatpush2.msra.mxu0 0.0
  %394 = vmatprep.mubr.f32.mxu0 0.0
  %395 = vmatmul.mubr.f32.gmra.mxu0 %v327
  %v396 = vpop.f32.mrf.mxu0
  %v397 = vadd.f32 0.0, %v396
  %v398 = vpop.f32.mrf.mxu0
  %399 = vdwg.mxu0
  %v400 = vadd.f32 %v329, %v397
  %v401 = vtanh.pop %v400
  %s402 = scalar_lea.vmem %s0, 40
  %v403 = vld [vmem:[%s402] sm:$0xff]
  %404 = vmatprep.subr.mxu0 0.0
  %405 = vmatpush1.msra.mxu0 %v31
  %406 = vmatprep.subr.mxu0 0.0
  %407 = vmatpush1.msra.mxu0 %v30
  %408 = vmatprep.subr.mxu0 0.0
  %409 = vmatpush1.msra.mxu0 %v29
  %410 = vmatprep.subr.mxu0 0.0
  %411 = vmatpush1.msra.mxu0 %v28
  %412 = vmatprep.subr.mxu0 0.0
  %413 = vmatpush1.msra.mxu0 %v27
  %414 = vmatprep.subr.mxu0 0.0
  %415 = vmatpush1.msra.mxu0 %v26
  %416 = vmatprep.subr.mxu0 0.0
  %417 = vmatpush1.msra.mxu0 %v25
  %418 = vmatprep.subr.mxu0 0.0
  %419 = vmatpush1.msra.mxu0 %v24
  %420 = vmatprep.subr.mxu0 0.0
  %421 = vmatpush1.msra.mxu0 %v23
  %422 = vmatprep.subr.mxu0 0.0
  %423 = vmatpush1.msra.mxu0 %v22
  %424 = vmatprep.subr.mxu0 0.0
  %425 = vmatpush1.msra.mxu0 %v21
  %426 = vmatprep.subr.mxu0 0.0
  %427 = vmatpush1.msra.mxu0 %v20
  %428 = vmatprep.subr.mxu0 0.0
  %429 = vmatpush1.msra.mxu0 %v19
  %430 = vmatprep.subr.mxu0 0.0
  %431 = vmatpush1.msra.mxu0 %v18
  %432 = vmatprep.subr.mxu0 0.0
  %433 = vmatpush1.msra.mxu0 %v17
  %434 = vmatprep.subr.mxu0 0.0
  %435 = vmatpush1.msra.mxu0 %v16
  %436 = vmatprep.subr.mxu0 0.0
  %437 = vmatpush2.msra.mxu0 0.0
  %438 = vmatprep.subr.mxu0 0.0
  %439 = vmatpush2.msra.mxu0 0.0
  %440 = vmatprep.subr.mxu0 0.0
  %441 = vmatpush2.msra.mxu0 0.0
  %442 = vmatprep.subr.mxu0 0.0
  %443 = vmatpush2.msra.mxu0 0.0
  %444 = vmatprep.subr.mxu0 0.0
  %445 = vmatpush2.msra.mxu0 0.0
  %446 = vmatprep.subr.mxu0 0.0
  %447 = vmatpush2.msra.mxu0 0.0
  %448 = vmatprep.subr.mxu0 0.0
  %449 = vmatpush2.msra.mxu0 0.0
  %450 = vmatprep.subr.mxu0 0.0
  %451 = vmatpush2.msra.mxu0 0.0
  %452 = vmatprep.subr.mxu0 0.0
  %453 = vmatpush2.msra.mxu0 0.0
  %454 = vmatprep.subr.mxu0 0.0
  %455 = vmatpush2.msra.mxu0 0.0
  %456 = vmatprep.subr.mxu0 0.0
  %457 = vmatpush2.msra.mxu0 0.0
  %458 = vmatprep.subr.mxu0 0.0
  %459 = vmatpush2.msra.mxu0 0.0
  %460 = vmatprep.subr.mxu0 0.0
  %461 = vmatpush2.msra.mxu0 0.0
  %462 = vmatprep.subr.mxu0 0.0
  %463 = vmatpush2.msra.mxu0 0.0
  %464 = vmatprep.subr.mxu0 0.0
  %465 = vmatpush2.msra.mxu0 0.0
  %466 = vmatprep.subr.mxu0 0.0
  %467 = vmatpush2.msra.mxu0 0.0
  %468 = vmatprep.mubr.f32.mxu0 0.0
  %469 = vmatmul.mubr.f32.gmra.mxu0 %v401
  %v470 = vpop.f32.mrf.mxu0
  %v471 = vadd.f32 0.0, %v470
  %v472 = vpop.f32.mrf.mxu0
  %473 = vdwg.mxu0
  %v474 = vadd.f32 %v403, %v471
  %v475 = vtanh.pop %v474
  %s476 = scalar_lea.vmem %s0, 48
  %v477 = vld [vmem:[%s476] sm:$0xff]
  %478 = vmatprep.subr.mxu0 0.0
  %479 = vmatpush1.msra.mxu0 %v31
  %480 = vmatprep.subr.mxu0 0.0
  %481 = vmatpush1.msra.mxu0 %v30
  %482 = vmatprep.subr.mxu0 0.0
  %483 = vmatpush1.msra.mxu0 %v29
  %484 = vmatprep.subr.mxu0 0.0
  %485 = vmatpush1.msra.mxu0 %v28
  %486 = vmatprep.subr.mxu0 0.0
  %487 = vmatpush1.msra.mxu0 %v27
  %488 = vmatprep.subr.mxu0 0.0
  %489 = vmatpush1.msra.mxu0 %v26
  %490 = vmatprep.subr.mxu0 0.0
  %491 = vmatpush1.msra.mxu0 %v25
  %492 = vmatprep.subr.mxu0 0.0
  %493 = vmatpush1.msra.mxu0 %v24
  %494 = vmatprep.subr.mxu0 0.0
  %495 = vmatpush1.msra.mxu0 %v23
  %496 = vmatprep.subr.mxu0 0.0
  %497 = vmatpush1.msra.mxu0 %v22
  %498 = vmatprep.subr.mxu0 0.0
  %499 = vmatpush1.msra.mxu0 %v21
  %500 = vmatprep.subr.mxu0 0.0
  %501 = vmatpush1.msra.mxu0 %v20
  %502 = vmatprep.subr.mxu0 0.0
  %503 = vmatpush1.msra.mxu0 %v19
  %504 = vmatprep.subr.mxu0 0.0
  %505 = vmatpush1.msra.mxu0 %v18
  %506 = vmatprep.subr.mxu0 0.0
  %507 = vmatpush1.msra.mxu0 %v17
  %508 = vmatprep.subr.mxu0 0.0
  %509 = vmatpush1.msra.mxu0 %v16
  %510 = vmatprep.subr.mxu0 0.0
  %511 = vmatpush2.msra.mxu0 0.0
  %512 = vmatprep.subr.mxu0 0.0
  %513 = vmatpush2.msra.mxu0 0.0
  %514 = vmatprep.subr.mxu0 0.0
  %515 = vmatpush2.msra.mxu0 0.0
  %516 = vmatprep.subr.mxu0 0.0
  %517 = vmatpush2.msra.mxu0 0.0
  %518 = vmatprep.subr.mxu0 0.0
  %519 = vmatpush2.msra.mxu0 0.0
  %520 = vmatprep.subr.mxu0 0.0
  %521 = vmatpush2.msra.mxu0 0.0
  %522 = vmatprep.subr.mxu0 0.0
  %523 = vmatpush2.msra.mxu0 0.0
  %524 = vmatprep.subr.mxu0 0.0
  %525 = vmatpush2.msra.mxu0 0.0
  %526 = vmatprep.subr.mxu0 0.0
  %527 = vmatpush2.msra.mxu0 0.0
  %528 = vmatprep.subr.mxu0 0.0
  %529 = vmatpush2.msra.mxu0 0.0
  %530 = vmatprep.subr.mxu0 0.0
  %531 = vmatpush2.msra.mxu0 0.0
  %532 = vmatprep.subr.mxu0 0.0
  %533 = vmatpush2.msra.mxu0 0.0
  %534 = vmatprep.subr.mxu0 0.0
  %535 = vmatpush2.msra.mxu0 0.0
  %536 = vmatprep.subr.mxu0 0.0
  %537 = vmatpush2.msra.mxu0 0.0
  %538 = vmatprep.subr.mxu0 0.0
  %539 = vmatpush2.msra.mxu0 0.0
  %540 = vmatprep.subr.mxu0 0.0
  %541 = vmatpush2.msra.mxu0 0.0
  %542 = vmatprep.mubr.f32.mxu0 0.0
  %543 = vmatmul.mubr.f32.gmra.mxu0 %v475
  %v544 = vpop.f32.mrf.mxu0
  %v545 = vadd.f32 0.0, %v544
  %v546 = vpop.f32.mrf.mxu0
  %547 = vdwg.mxu0
  %v548 = vadd.f32 %v477, %v545
  %v549 = vtanh.pop %v548
  %s550 = scalar_lea.vmem %s0, 56
  %v551 = vld [vmem:[%s550] sm:$0xff]
  %552 = vmatprep.subr.mxu0 0.0
  %553 = vmatpush1.msra.mxu0 %v31
  %554 = vmatprep.subr.mxu0 0.0
  %555 = vmatpush1.msra.mxu0 %v30
  %556 = vmatprep.subr.mxu0 0.0
  %557 = vmatpush1.msra.mxu0 %v29
  %558 = vmatprep.subr.mxu0 0.0
  %559 = vmatpush1.msra.mxu0 %v28
  %560 = vmatprep.subr.mxu0 0.0
  %561 = vmatpush1.msra.mxu0 %v27
  %562 = vmatprep.subr.mxu0 0.0
  %563 = vmatpush1.msra.mxu0 %v26
  %564 = vmatprep.subr.mxu0 0.0
  %565 = vmatpush1.msra.mxu0 %v25
  %566 = vmatprep.subr.mxu0 0.0
  %567 = vmatpush1.msra.mxu0 %v24
  %568 = vmatprep.subr.mxu0 0.0
  %569 = vmatpush1.msra.mxu0 %v23
  %570 = vmatprep.subr.mxu0 0.0
  %571 = vmatpush1.msra.mxu0 %v22
  %572 = vmatprep.subr.mxu0 0.0
  %573 = vmatpush1.msra.mxu0 %v21
  %574 = vmatprep.subr.mxu0 0.0
  %575 = vmatpush1.msra.mxu0 %v20
  %576 = vmatprep.subr.mxu0 0.0
  %577 = vmatpush1.msra.mxu0 %v19
  %578 = vmatprep.subr.mxu0 0.0
  %579 = vmatpush1.msra.mxu0 %v18
  %580 = vmatprep.subr.mxu0 0.0
  %581 = vmatpush1.msra.mxu0 %v17
  %582 = vmatprep.subr.mxu0 0.0
  %583 = vmatpush1.msra.mxu0 %v16
  %584 = vmatprep.subr.mxu0 0.0
  %585 = vmatpush2.msra.mxu0 0.0
  %586 = vmatprep.subr.mxu0 0.0
  %587 = vmatpush2.msra.mxu0 0.0
  %588 = vmatprep.subr.mxu0 0.0
  %589 = vmatpush2.msra.mxu0 0.0
  %590 = vmatprep.subr.mxu0 0.0
  %591 = vmatpush2.msra.mxu0 0.0
  %592 = vmatprep.subr.mxu0 0.0
  %593 = vmatpush2.msra.mxu0 0.0
  %594 = vmatprep.subr.mxu0 0.0
  %595 = vmatpush2.msra.mxu0 0.0
  %596 = vmatprep.subr.mxu0 0.0
  %597 = vmatpush2.msra.mxu0 0.0
  %598 = vmatprep.subr.mxu0 0.0
  %599 = vmatpush2.msra.mxu0 0.0
  %600 = vmatprep.subr.mxu0 0.0
  %601 = vmatpush2.msra.mxu0 0.0
  %602 = vmatprep.subr.mxu0 0.0
  %603 = vmatpush2.msra.mxu0 0.0
  %604 = vmatprep.subr.mxu0 0.0
  %605 = vmatpush2.msra.mxu0 0.0
  %606 = vmatprep.subr.mxu0 0.0
  %607 = vmatpush2.msra.mxu0 0.0
  %608 = vmatprep.subr.mxu0 0.0
  %609 = vmatpush2.msra.mxu0 0.0
  %610 = vmatprep.subr.mxu0 0.0
  %611 = vmatpush2.msra.mxu0 0.0
  %612 = vmatprep.subr.mxu0 0.0
  %613 = vmatpush2.msra.mxu0 0.0
  %614 = vmatprep.subr.mxu0 0.0
  %615 = vmatpush2.msra.mxu0 0.0
  %616 = vmatprep.mubr.f32.mxu0 0.0
  %617 = vmatmul.mubr.f32.gmra.mxu0 %v549
  %v618 = vpop.f32.mrf.mxu0
  %v619 = vadd.f32 0.0, %v618
  %v620 = vpop.f32.mrf.mxu0
  %621 = vdwg.mxu0
  %v622 = vadd.f32 %v551, %v619
  %v623 = vtanh.pop %v622
  %624 = vst [vmem:[%s2] sm:$0xff] %v623
  // Predicated region
  $region14: #{rnn_baseline_forward.1} parent=0 // pred_check
    _
  $region15: #{rnn_baseline_forward.1} parent=0 // pred_check_branch
    %626 = sbr.rel (0) target = $region17
  $region16: #{rnn_baseline_forward.1} parent=0 // pred_region
    _
  $region17: #{rnn_baseline_forward.1} parent=0 // pred_fallthru
    _
  // Predicated region
  $region18: #{rnn_baseline_forward.1} parent=0 // pred_check
    _
  $region19: #{rnn_baseline_forward.1} parent=0 // pred_check_branch
    %628 = sbr.rel (0) target = $region21
  $region20: #{rnn_baseline_forward.1} parent=0 // pred_region
    _
  $region21: #{rnn_baseline_forward.1} parent=0 // pred_fallthru
    _

</llo_original>
